<compile_context>
chip_gen: v5e
topology: v5e:2x2
jax: 0.10.0
libtpu: 0.0.40
codegen_flags: <defaults>
</compile_context>

<pallas_src>
import jax
import jax.numpy as jnp
from jax.experimental import pallas as pl
from jax.experimental.pallas import tpu as pltpu


def _round_up(x, m):
    return (x + m - 1) // m * m


def _linear_relu_kernel(x_ref, w_ref, b_ref, o_ref):
    # x_ref: (tm, in_f)  w_ref: (in_f, tn)  b_ref: (1, tn)  o_ref: (tm, tn)
    acc = jnp.dot(
        x_ref[...], w_ref[...], preferred_element_type=jnp.float32
    )                                   # MXU matmul, f32 accumulate
    acc = acc + b_ref[...]              # bias broadcast over rows (VPU, f32)
    o_ref[...] = jnp.maximum(acc, 0.0).astype(o_ref.dtype)   # ReLU, cast at store


def graph_conv_edges(h, weights, bias):
    """Pallas implementation of GraphConv_edges.forward on edge.data['h'].

    h:       [num_edges, in_features]     edge feature matrix
    weights: [out_features, in_features]  (PyTorch nn.Linear convention)
    bias:    [out_features]
    returns: [num_edges, out_features]  = relu(h @ weights^T + bias)
    """
    num_edges, in_f = h.shape
    out_f, in_f_w = weights.shape
    assert in_f == in_f_w, "in_features mismatch"

    bytes_per = jnp.dtype(h.dtype).itemsize
    sublane = {1: 32, 2: 16, 4: 8}.get(bytes_per, 8)

    # ---- Generation-aware VMEM budget (v5e/v6e: 128 MiB, v7x: 64 MiB). -------
    try:
        vmem_cap = int(pltpu.get_tpu_info().vmem_capacity_bytes)
    except Exception:  # pragma: no cover - conservative fallback
        vmem_cap = 64 << 20
    usable = max(vmem_cap - (16 << 20), 24 << 20)   # leave compiler headroom

    # ---- N (out_features) tiling: keep the full-width weight resident only if
    #      its double-buffered slab fits ~1/3 of the budget; otherwise tile N in
    #      multiples of 128 so the weight is never fully resident (v7x-safe). ---
    w_budget = usable // 3
    if 2 * in_f * out_f * bytes_per <= w_budget:
        tile_n = out_f
    else:
        tile_n = max(128, (w_budget // (2 * in_f * bytes_per)) // 128 * 128)
        tile_n = min(tile_n, out_f)
        # TODO(synk): add a K (in_features) grid axis for the case where even a
        # single 128-lane weight column slab exceeds the VMEM budget.
    n_blocks = pl.cdiv(out_f, tile_n)

    # ---- M (edge rows) tiling from VMEM headroom and ~4 MiB/step streaming. --
    remaining = usable - 2 * in_f * tile_n * bytes_per - 2 * tile_n * 4
    remaining = max(remaining, 2 << 20)
    tile_m_vmem = remaining // (2 * (in_f + tile_n) * bytes_per)   # double-buffered x + out
    tile_m_stream = (4 << 20) // ((in_f + tile_n) * bytes_per)     # amortize ~0.35us/step
    tile_m = min(tile_m_vmem, tile_m_stream)
    # Keep >=4 row blocks when possible so "parallel" shards rows across 2 TCs.
    tile_m = min(tile_m, _round_up(pl.cdiv(num_edges, 4), sublane))
    tile_m = max(sublane, (tile_m // sublane) * sublane)
    m_blocks = pl.cdiv(num_edges, tile_m)

    # ---- VMEM limit: count weight/bias as double-buffered; cap below physical.
    vmem_need = (
        2 * tile_m * in_f * bytes_per        # double-buffered activation tile
        + 2 * tile_m * tile_n * bytes_per    # double-buffered output tile
        + 2 * in_f * tile_n * bytes_per      # weight slab (double-buffered by default)
        + 2 * tile_n * 4                     # bias row (f32)
    )
    vmem_limit = int(min(usable, max(32 << 20, int(vmem_need * 1.25))))

    # One-time XLA relayouts (outside the kernel): transpose W, reshape bias.
    w_t = weights.T.astype(h.dtype)                      # [in_f, out_f]
    bias2d = bias.astype(jnp.float32).reshape(1, out_f)  # epilogue stays in f32

    cost = pl.CostEstimate(
        flops=2 * num_edges * in_f * out_f,
        transcendentals=0,
        bytes_accessed=(num_edges * in_f            # h stream in
                        + in_f * out_f              # weights
                        + num_edges * out_f         # output stream
                        ) * bytes_per + out_f * 4,  # bias
    )

    return pl.pallas_call(
        _linear_relu_kernel,
        out_shape=jax.ShapeDtypeStruct((num_edges, out_f), h.dtype),
        grid_spec=pltpu.PrefetchScalarGridSpec(
            num_scalar_prefetch=0,
            grid=(m_blocks, n_blocks),
            in_specs=[
                # tile of edge rows, full feature width (streamed; partial last
                # block handled by Pallas masking -- no jnp.pad of h needed)
                pl.BlockSpec((tile_m, in_f), lambda i, j: (i, 0)),
                # weight column slab (full width when it fits, else 128-multiple)
                pl.BlockSpec((in_f, tile_n), lambda i, j: (0, j)),
                # bias row slab
                pl.BlockSpec((1, tile_n), lambda i, j: (0, j)),
            ],
            out_specs=pl.BlockSpec((tile_m, tile_n), lambda i, j: (i, j)),
        ),
        compiler_params=pltpu.CompilerParams(
            dimension_semantics=("parallel", "parallel"),
            vmem_limit_bytes=vmem_limit,
        ),
        cost_estimate=cost,
    )(h, w_t, bias2d)


if __name__ == "__main__":
    key = jax.random.PRNGKey(0)
    k_h, k_w, k_b = jax.random.split(key, 3)

    num_edges = 200      # deliberately NOT a multiple of the tile size
    in_features = 32
    out_features = 64

    h = jax.random.normal(k_h, (num_edges, in_features), dtype=jnp.float32)
    eweight = jax.random.normal(k_w, (out_features, in_features), dtype=jnp.float32) * 0.1
    ebias = jax.random.normal(k_b, (out_features,), dtype=jnp.float32) * 0.1

    out = graph_conv_edges(h, eweight, ebias)
    out = jax.block_until_ready(out)

    # Pure-JAX reference check: relu(h @ W^T + b).
    ref = jnp.maximum(h @ eweight.T + ebias[None, :], 0.0)
    assert out.shape == (num_edges, out_features)
    assert jnp.allclose(out, ref, atol=1e-5, rtol=1e-5), "mismatch vs reference"

    print("KERNEL_OK")
</pallas_src>

<mosaic_0001>
module attributes {stable_mosaic.version = 11 : i64} {
  func.func @_linear_relu_kernel(%arg0: i32, %arg1: i32, %arg2: memref<56x32xf32, #tpu.memory_space<vmem>>, %arg3: memref<32x64xf32, #tpu.memory_space<vmem>>, %arg4: memref<1x64xf32, #tpu.memory_space<vmem>>, %arg5: memref<56x64xf32, #tpu.memory_space<vmem>>) attributes {dimension_semantics = [#tpu.dimension_semantics<parallel>, #tpu.dimension_semantics<parallel>], iteration_bounds = array<i64: 4, 1>, scalar_prefetch = 0 : i64, scratch_operands = 0 : i64, tpu.core_type = #tpu.core_type<tc>, window_params = [{transform_indices = @transform_0, window_bounds = array<i64: 56, 32>}, {transform_indices = @transform_1, window_bounds = array<i64: 32, 64>}, {transform_indices = @transform_2, window_bounds = array<i64: 1, 64>}, {transform_indices = @transform_3, window_bounds = array<i64: 56, 64>}]} {
    %c0 = arith.constant 0 : index
    %c0_0 = arith.constant 0 : index
    %0 = vector.load %arg2[%c0, %c0_0] : memref<56x32xf32, #tpu.memory_space<vmem>>, vector<56x32xf32>
    %c0_1 = arith.constant 0 : index
    %c0_2 = arith.constant 0 : index
    %1 = vector.load %arg3[%c0_1, %c0_2] : memref<32x64xf32, #tpu.memory_space<vmem>>, vector<32x64xf32>
    %cst = arith.constant dense<0.000000e+00> : vector<56x64xf32>
    %2 = tpu.matmul %0, %1, %cst {dimension_numbers = #tpu.dot_dimension_numbers<[1], [0], [0], [1], [0, 0, 1, 1], [], []>} : vector<56x32xf32>, vector<32x64xf32>, vector<56x64xf32> -> vector<56x64xf32>
    %c0_3 = arith.constant 0 : index
    %c0_4 = arith.constant 0 : index
    %3 = vector.load %arg4[%c0_3, %c0_4] : memref<1x64xf32, #tpu.memory_space<vmem>>, vector<1x64xf32>
    %4 = vector.broadcast %3 : vector<1x64xf32> to vector<56x64xf32>
    %5 = arith.addf %2, %4 : vector<56x64xf32>
    %cst_5 = arith.constant 0.000000e+00 : f32
    %6 = vector.broadcast %cst_5 : f32 to vector<56x64xf32>
    %7 = arith.maximumf %5, %6 : vector<56x64xf32>
    %c0_6 = arith.constant 0 : index
    %c0_7 = arith.constant 0 : index
    %8 = vector.load %arg5[%c0_6, %c0_7] : memref<56x64xf32, #tpu.memory_space<vmem>>, vector<56x64xf32>
    tpu.vector_store %arg5[%c0_6, %c0_7], %7 {strides = array<i32>} : memref<56x64xf32, #tpu.memory_space<vmem>>, vector<56x64xf32>,
    return
  }
  func.func @transform_0(%arg0: i32, %arg1: i32) -> (i32, i32) {
    %c0_i32 = arith.constant 0 : i32
    %c0_i32_0 = arith.constant 0 : i32
    return %arg0, %c0_i32 : i32, i32
  }
  func.func @transform_1(%arg0: i32, %arg1: i32) -> (i32, i32) {
    %c0_i32 = arith.constant 0 : i32
    %c0_i32_0 = arith.constant 0 : i32
    return %c0_i32, %arg1 : i32, i32
  }
  func.func @transform_2(%arg0: i32, %arg1: i32) -> (i32, i32) {
    %c0_i32 = arith.constant 0 : i32
    %c0_i32_0 = arith.constant 0 : i32
    return %c0_i32, %arg1 : i32, i32
  }
  func.func @transform_3(%arg0: i32, %arg1: i32) -> (i32, i32) {
    %c0_i32 = arith.constant 0 : i32
    return %arg0, %arg1 : i32, i32
  }
}

</mosaic_0001>

<llo_original>
// kernel: tpu_custom_call.1
$region0: #{tpu_custom_call.1}
  #allocation0 [shape = 'u32[]', space=smem, size = 0x4, offset = 0x4, fixed_abs, tag = 'smem constant byte address 0x4 - core index']
  #allocation1 [shape = 'u32[72,128]{1,0:T(1,128)}', space=vmem, size = 0x9000, scoped, tag = 'internal scratch']
  %s0 = inlined_call_operand.vmem [shape: f32[200,32], index: 0, kind: input, shape index: {}]
  %s1 = inlined_call_operand.vmem [shape: f32[32,64], index: 1, kind: input, shape index: {}]
  %s2 = inlined_call_operand.vmem [shape: f32[1,64], index: 2, kind: input, shape index: {}]
  %s3 = inlined_call_operand.vmem [shape: f32[200,64], index: 3, kind: output, shape index: {}]
  %s4 = sld [smem:[#allocation0]]
  $region93: #{tpu_custom_call.1} parent=0
    _
  %s6 = ssub.s32 1, %s4
  %s7 = scalar_select 0, %s6, %s4
  $region1: #{tpu_custom_call.1} parent=0
    #allocation2 [shape = 'u8[57344]{0}', space=vmem, size = 0xe000, scoped, tag = 'output window, operand 0']
    loop: start=0, step=1, limit=6
    $region2: #{tpu_custom_call.1} parent=1 // loop_pre_header
      _
    $region3: #{tpu_custom_call.1} parent=1 // loop_header
      %s9 = sphi 0, %s13
      %p10 = scmp.ge.s32.totalorder %s9, 6
      %s16 = sphi 0, %s28
      %s17 = sphi 0, %s24
      %s18 = sphi 0, %s16
      %s19 = sphi 0, %s17
      %s20 = sphi 0, %s18
      %s21 = sphi 0, %s19
      %s31 = sphi 0, %s33
      %s34 = sphi 0, %s31
      %s35 = sphi 0, %s34
      %s51 = sphi 0, %s35
      %s57 = sphi 0, %s59
      %s60 = sphi 0, %s57
      %s61 = sphi 0, %s60
      %s77 = sphi 0, %s61
      %s83 = sphi 0, %s85
      %s86 = sphi 0, %s83
      %s87 = sphi 0, %s86
      %s103 = sphi 0, %s87
      %s111 = sphi 0, %s113
      %s114 = sphi 0, %s111
      %s115 = sphi 0, %s114
      %s131 = sphi 0, %s115
    $region4: #{tpu_custom_call.1} parent=1 // loop_header_branch
      %12 = sbr.rel (%p10) target = $region8
    $region5: #{tpu_custom_call.1} parent=1 // loop_body
      %s14 = ssub.s32 %s9, 1
      %s15 = ssub.s32 %s9, 2
      %s22 = sadd.s32 1, %s17
      %p23 = scmp.ge.s32.totalorder %s22, 1
      %s24 = scalar_select %p23, 0, %s22
      %s25 = sadd.s32 1, %s16
      %s26 = scalar_select %p23, %s25, %s16
      %p27 = scmp.ge.s32.totalorder %s26, 4
      %s28 = scalar_select %p27, 0, %s26
      %s29 = ssub.s32 %s16, %s28
      %p30 = scmp.eq.s32.totalorder %s29, 0
      %s32 = sadd.s32 %s31, 1
      %s33 = scalar_select %p30, %s31, %s32
      %p36 = pneg %p30
      %p37 = scmp.eq.s32.totalorder %s9, 3
      %p38 = por %p36, %p37
      %p39 = scmp.ne.s32.totalorder %s31, %s34
      %p40 = scmp.eq.s32.totalorder %s9, 0
      %p41 = por %p39, %p40
      %p42 = scmp.ne.s32.totalorder %s31, %s34
      %p43 = scmp.eq.s32.totalorder %s14, 3
      %p44 = por %p42, %p43
      %p45 = scmp.ne.s32.totalorder %s34, %s35
      %p46 = scmp.eq.s32.totalorder %s14, 0
      %p47 = por %p45, %p46
      %p48 = scmp.ne.s32.totalorder %s34, %s35
      %p49 = scmp.eq.s32.totalorder %s15, 3
      %p50 = por %p48, %p49
      %p52 = scmp.ne.s32.totalorder %s35, %s51
      %p53 = scmp.eq.s32.totalorder %s15, 0
      %p54 = por %p52, %p53
      %s55 = ssub.s32 %s17, %s24
      %p56 = scmp.eq.s32.totalorder %s55, 0
      %s58 = sadd.s32 %s57, 1
      %s59 = scalar_select %p56, %s57, %s58
      %p62 = pneg %p56
      %p63 = scmp.eq.s32.totalorder %s9, 3
      %p64 = por %p62, %p63
      %p65 = scmp.ne.s32.totalorder %s57, %s60
      %p66 = scmp.eq.s32.totalorder %s9, 0
      %p67 = por %p65, %p66
      %p68 = scmp.ne.s32.totalorder %s57, %s60
      %p69 = scmp.eq.s32.totalorder %s14, 3
      %p70 = por %p68, %p69
      %p71 = scmp.ne.s32.totalorder %s60, %s61
      %p72 = scmp.eq.s32.totalorder %s14, 0
      %p73 = por %p71, %p72
      %p74 = scmp.ne.s32.totalorder %s60, %s61
      %p75 = scmp.eq.s32.totalorder %s15, 3
      %p76 = por %p74, %p75
      %p78 = scmp.ne.s32.totalorder %s61, %s77
      %p79 = scmp.eq.s32.totalorder %s15, 0
      %p80 = por %p78, %p79
      %s81 = ssub.s32 %s17, %s24
      %p82 = scmp.eq.s32.totalorder %s81, 0
      %s84 = sadd.s32 %s83, 1
      %s85 = scalar_select %p82, %s83, %s84
      %p88 = pneg %p82
      %p89 = scmp.eq.s32.totalorder %s9, 3
      %p90 = por %p88, %p89
      %p91 = scmp.ne.s32.totalorder %s83, %s86
      %p92 = scmp.eq.s32.totalorder %s9, 0
      %p93 = por %p91, %p92
      %p94 = scmp.ne.s32.totalorder %s83, %s86
      %p95 = scmp.eq.s32.totalorder %s14, 3
      %p96 = por %p94, %p95
      %p97 = scmp.ne.s32.totalorder %s86, %s87
      %p98 = scmp.eq.s32.totalorder %s14, 0
      %p99 = por %p97, %p98
      %p100 = scmp.ne.s32.totalorder %s86, %s87
      %p101 = scmp.eq.s32.totalorder %s15, 3
      %p102 = por %p100, %p101
      %p104 = scmp.ne.s32.totalorder %s87, %s103
      %p105 = scmp.eq.s32.totalorder %s15, 0
      %p106 = por %p104, %p105
      %s107 = ssub.s32 %s16, %s28
      %s108 = ssub.s32 %s17, %s24
      %s109 = sor.u32 %s107, %s108
      %p110 = scmp.eq.s32.totalorder %s109, 0
      %s112 = sadd.s32 %s111, 1
      %s113 = scalar_select %p110, %s111, %s112
      %p116 = pneg %p110
      %p117 = scmp.eq.s32.totalorder %s9, 3
      %p118 = por %p116, %p117
      %p119 = scmp.ne.s32.totalorder %s111, %s114
      %p120 = scmp.eq.s32.totalorder %s9, 0
      %p121 = por %p119, %p120
      %p122 = scmp.ne.s32.totalorder %s111, %s114
      %p123 = scmp.eq.s32.totalorder %s14, 3
      %p124 = por %p122, %p123
      %p125 = scmp.ne.s32.totalorder %s114, %s115
      %p126 = scmp.eq.s32.totalorder %s14, 0
      %p127 = por %p125, %p126
      %p128 = scmp.ne.s32.totalorder %s114, %s115
      %p129 = scmp.eq.s32.totalorder %s15, 3
      %p130 = por %p128, %p129
      %p132 = scmp.ne.s32.totalorder %s115, %s131
      %p133 = scmp.eq.s32.totalorder %s15, 0
      %p134 = por %p132, %p133
      %p135 = scmp.le.s32.totalorder 1, %s9
      %p136 = scmp.lt.s32.totalorder %s9, 5
      %p137 = pnand %p135, %p136
      %p138 = pneg %p137
      // Predicated region
      $region9: #{tpu_custom_call.1} parent=5 // pred_check
        _
      $region10: #{tpu_custom_call.1} parent=5 // pred_check_branch
        %140 = sbr.rel (%p137) target = $region12
      $region11: #{tpu_custom_call.1} parent=5 // pred_region
        %s141 = ssub.s32 %s9, 1
        // Predicated region
        $region13: #{tpu_custom_call.1} parent=11 // pred_check
          %p142 = pneg %p73
        $region14: #{tpu_custom_call.1} parent=11 // pred_check_branch
          %144 = sbr.rel (%p142) target = $region16
        $region15: #{tpu_custom_call.1} parent=11 // pred_region
          %p145 = scmp.lt.s32.totalorder %s19, 0
          %s146 = scalar_select %p145, %s19, 0
          %s147 = smul.addr %s146, 8
          %s148 = scalar_lea.vmem %s1, %s147
        $region16: #{tpu_custom_call.1} parent=11 // pred_fallthru
          _
        // Predicated region
        $region17: #{tpu_custom_call.1} parent=11 // pred_check
          %p149 = pneg %p99
        $region18: #{tpu_custom_call.1} parent=11 // pred_check_branch
          %151 = sbr.rel (%p149) target = $region20
        $region19: #{tpu_custom_call.1} parent=11 // pred_region
          %p152 = scmp.lt.s32.totalorder %s19, 0
          %s153 = scalar_select %p152, %s19, 0
          %s154 = scalar_lea.vmem %s2, %s153
        $region20: #{tpu_custom_call.1} parent=11 // pred_fallthru
          _
      $region12: #{tpu_custom_call.1} parent=5 // pred_fallthru
        _
      %p155 = scmp.lt.s32.totalorder %s9, 4
      // Predicated region
      $region21: #{tpu_custom_call.1} parent=5 // pred_check
        %p156 = pneg %p155
      $region22: #{tpu_custom_call.1} parent=5 // pred_check_branch
        %158 = sbr.rel (%p156) target = $region24
      $region23: #{tpu_custom_call.1} parent=5 // pred_region
        // Predicated region
        $region25: #{tpu_custom_call.1} parent=23 // pred_check
          %p159 = pneg %p41
        $region26: #{tpu_custom_call.1} parent=23 // pred_check_branch
          %161 = sbr.rel (%p159) target = $region28
        $region27: #{tpu_custom_call.1} parent=23 // pred_region
          %s162 = smul.u32 7, %s16
          %s163 = ssub.s32 25, %s162
          %p164 = scmp.lt.s32.totalorder %s163, 7
          %s165 = scalar_select %p164, %s163, 7
          %s166 = smul.u32 8, %s165
          %p167 = scmp.lt.s32.totalorder %s162, 24
          %s168 = scalar_select %p167, %s162, 24
          %s169 = smul.addr %s168, 8
          %s170 = scalar_lea.vmem %s0, %s169
          %s171 = smul.u32 7, %s16
          %s172 = ssub.s32 25, %s171
          %p173 = scmp.lt.s32.totalorder %s172, 7
          %s174 = scalar_select %p173, %s172, 7
          %s175 = smul.u32 8, %s174
        $region28: #{tpu_custom_call.1} parent=23 // pred_fallthru
          _
      $region24: #{tpu_custom_call.1} parent=5 // pred_fallthru
        _
      %p176 = scmp.le.s32.totalorder 1, %s9
      %p177 = scmp.lt.s32.totalorder %s9, 5
      %p178 = pnand %p176, %p177
      %p179 = pneg %p178
      // Predicated region
      $region29: #{tpu_custom_call.1} parent=5 // pred_check
        _
      $region30: #{tpu_custom_call.1} parent=5 // pred_check_branch
        %181 = sbr.rel (%p178) target = $region32
      $region31: #{tpu_custom_call.1} parent=5 // pred_region
        %s182 = ssub.s32 %s9, 1
        %s183 = smul.u32 7, %s18
        %s184 = ssub.s32 25, %s183
        %p185 = scmp.lt.s32.totalorder %s184, 7
        %s186 = scalar_select %p185, %s184, 7
        %s187 = smul.u32 8, %s186
        %p188 = scmp.lt.s32.totalorder %s183, 24
        %s189 = scalar_select %p188, %s183, 24
        %s190 = smul.addr %s189, 8
        %s191 = scalar_lea.vmem %s0, %s190
        %p192 = pneg %p47
        %p193 = pneg %p44
        %p194 = scmp.lt.s32.totalorder %s19, 0
        %s195 = scalar_select %p194, %s19, 0
        %s196 = smul.addr %s195, 8
        %s197 = scalar_lea.vmem %s1, %s196
        %p198 = pneg %p73
        %p199 = pneg %p70
        %p200 = scmp.lt.s32.totalorder %s19, 0
        %s201 = scalar_select %p200, %s19, 0
        %s202 = scalar_lea.vmem %s2, %s201
        %p203 = pneg %p99
        %p204 = pneg %p96
        %p205 = pneg %p127
        %p206 = pneg %p124
        %s207 = sand.u32 %s114, 1
        %s208 = sand.u32 %s114, 1
        %s209 = smul.addr %s208, 56
        %s210 = scalar_lea.vmem [#allocation2], %s209
        %s211 = smul.u32 7, %s18
        %s212 = ssub.s32 25, %s211
        %p213 = scmp.lt.s32.totalorder %s212, 7
        %s214 = scalar_select %p213, %s212, 7
        %s215 = smul.u32 8, %s214
        %p216 = scmp.lt.s32.totalorder %s211, 24
        %s217 = scalar_select %p216, %s211, 24
        %s218 = smul.addr %s217, 8
        %s219 = scalar_lea.vmem %s0, %s218
        %s220 = smul.u32 7, %s18
        %s221 = ssub.s32 25, %s220
        %p222 = scmp.lt.s32.totalorder %s221, 7
        %s223 = scalar_select %p222, %s221, 7
        %s224 = smul.u32 8, %s223
        %p225 = scmp.lt.s32.totalorder %s19, 0
        %s226 = scalar_select %p225, %s19, 0
        %s227 = smul.addr %s226, 8
        %s228 = scalar_lea.vmem %s1, %s227
        %p229 = scmp.lt.s32.totalorder %s19, 0
        %s230 = scalar_select %p229, %s19, 0
        %s231 = scalar_lea.vmem %s2, %s230
        %s232 = smul.u32 7, %s18
        %s233 = ssub.s32 25, %s232
        %p234 = scmp.lt.s32.totalorder %s233, 7
        %s235 = scalar_select %p234, %s233, 7
        %s236 = smul.u32 8, %s235
        %v237 = vld [vmem:[%s219] sm:$0xff]
        %v238 = vld [vmem:[%s219 + $0x8] sm:$0xff]
        %v239 = vld [vmem:[%s219 + $0x10] sm:$0xff]
        %v240 = vld [vmem:[%s219 + $0x18] sm:$0xff]
        %v241 = vld [vmem:[%s219 + $0x20] sm:$0xff]
        %v242 = vld [vmem:[%s219 + $0x28] sm:$0xff]
        %v243 = vld [vmem:[%s219 + $0x30] sm:$0xff]
        %v244 = vld [vmem:[%s228] sm:$0xff]
        %v245 = vld [vmem:[%s228 + $0x8] sm:$0xff]
        %v246 = vld [vmem:[%s228 + $0x10] sm:$0xff]
        %v247 = vld [vmem:[%s228 + $0x18] sm:$0xff]
        %v248 = vld [vmem:[%s231] sm:$0x1]
        %v250 = vperm.slane %v248, 0
        %vm252 = vcmask 261120
        %v254 = vsel %vm252, %v237, 0
        %v257 = vsel %vm252, %v238, 0
        %v260 = vsel %vm252, %v239, 0
        %v263 = vsel %vm252, %v240, 0
        %v266 = vsel %vm252, %v241, 0
        %v269 = vsel %vm252, %v242, 0
        %v272 = vsel %vm252, %v243, 0
        %274 = vmatpush.msra.mxu0 0.0
        %275 = vmatpush.msra.mxu0 0.0
        %276 = vmatpush.msra.mxu0 0.0
        %277 = vmatpush.msra.mxu0 0.0
        %278 = vmatpush.msra.mxu0 0.0
        %279 = vmatpush.msra.mxu0 0.0
        %280 = vmatpush.msra.mxu0 0.0
        %281 = vmatpush.msra.mxu0 0.0
        %282 = vmatpush.msra.mxu0 0.0
        %283 = vmatpush.msra.mxu0 0.0
        %284 = vmatpush.msra.mxu0 0.0
        %285 = vmatpush.msra.mxu0 0.0
        %286 = vmatpush.msra.mxu0 %v247
        %287 = vmatpush.msra.mxu0 %v246
        %288 = vmatpush.msra.mxu0 %v245
        %289 = vmatpush.msra.mxu0 %v244
        %290 = vmatmul.f32.gmra.mxu0 %v254
        %v291 = vpop.f32.mrf.mxu0
        %v292 = vadd.f32 %v250, %v291
        %293 = vmatmul.f32.gmra.mxu0 %v257
        %v294 = vpop.f32.mrf.mxu0
        %v295 = vadd.f32 %v250, %v294
        %296 = vmatmul.f32.gmra.mxu0 %v260
        %v297 = vpop.f32.mrf.mxu0
        %v298 = vadd.f32 %v250, %v297
        %299 = vmatmul.f32.gmra.mxu0 %v263
        %v300 = vpop.f32.mrf.mxu0
        %v301 = vadd.f32 %v250, %v300
        %302 = vmatmul.f32.gmra.mxu0 %v266
        %v303 = vpop.f32.mrf.mxu0
        %v304 = vadd.f32 %v250, %v303
        %305 = vmatmul.f32.gmra.mxu0 %v269
        %v306 = vpop.f32.mrf.mxu0
        %v307 = vadd.f32 %v250, %v306
        %308 = vmatmul.f32.gmra.mxu0 %v272
        %v309 = vpop.f32.mrf.mxu0
        %v310 = vadd.f32 %v250, %v309
        %311 = vdwg.mxu0
        %v312 = vmax.f32 %v292, 0.0
        %v313 = vmax.f32 %v295, 0.0
        %v314 = vmax.f32 %v298, 0.0
        %v315 = vmax.f32 %v301, 0.0
        %v316 = vmax.f32 %v304, 0.0
        %v317 = vmax.f32 %v307, 0.0
        %v318 = vmax.f32 %v310, 0.0
        %vm319 = vcmask 523264
        %320 = vst.msk [vmem:[%s210] sm:$0xff] %vm319, %v312
        %321 = vst.msk [vmem:[%s210 + $0x8] sm:$0xff] %vm319, %v313
        %322 = vst.msk [vmem:[%s210 + $0x10] sm:$0xff] %vm319, %v314
        %323 = vst.msk [vmem:[%s210 + $0x18] sm:$0xff] %vm319, %v315
        %324 = vst.msk [vmem:[%s210 + $0x20] sm:$0xff] %vm319, %v316
        %325 = vst.msk [vmem:[%s210 + $0x28] sm:$0xff] %vm319, %v317
        %326 = vst.msk [vmem:[%s210 + $0x30] sm:$0xff] %vm319, %v318
        %s327 = sand.u32 %s114, 1
        %s328 = sand.u32 %s114, 1
        %s329 = smul.addr %s328, 56
        %s330 = scalar_lea.vmem [#allocation2], %s329
        // Predicated region
        $region33: #{tpu_custom_call.1} parent=31 // pred_check
          %p331 = pneg %p124
        $region34: #{tpu_custom_call.1} parent=31 // pred_check_branch
          %333 = sbr.rel (%p331) target = $region36
        $region35: #{tpu_custom_call.1} parent=31 // pred_region
          %s334 = smul.u32 7, %s18
          %s335 = ssub.s32 25, %s334
          %p336 = scmp.lt.s32.totalorder %s335, 7
          %s337 = scalar_select %p336, %s335, 7
          %s338 = smul.u32 8, %s337
          %p339 = scmp.ne.s32.totalorder 0, %s338
          %s340 = sadd.s32 %s19, %s334
          %s341 = smul.addr %s340, 8
          %s342 = scalar_lea.vmem %s3, %s341
          // Predicated region
          $region37: #{tpu_custom_call.1} parent=35 // pred_check
            %p343 = pneg %p339
          $region38: #{tpu_custom_call.1} parent=35 // pred_check_branch
            %345 = sbr.rel (%p343) target = $region40
          $region39: #{tpu_custom_call.1} parent=35 // pred_region
            // Predicated region
            $region41: #{tpu_custom_call.1} parent=39 // pred_check
              _
            $region42: #{tpu_custom_call.1} parent=39 // pred_check_branch
              %347 = sbr.rel (0) target = $region44
            $region43: #{tpu_custom_call.1} parent=39 // pred_region
              // Predicated region
              $region63: #{tpu_custom_call.1} parent=43 // pred_check
                _
              $region64: #{tpu_custom_call.1} parent=43 // pred_check_branch
                %410 = sbr.rel (0) target = $region66
              $region65: #{tpu_custom_call.1} parent=43 // pred_region
                %s411 = sdiv.u32.pop %s337, 7
                %s412 = srem.u32.pop %s337, 7
                // While loop
                $region67: #{tpu_custom_call.1} parent=65 // loop_pre_header
                  _
                $region68: #{tpu_custom_call.1} parent=65 // loop_header
                  %s414 = sphi 0, %s416
                  %p415 = scmp.ge.s32.totalorder %s414, %s411
                  %s419 = sphi 0, %s438
                  %s420 = sphi %s330, %s441
                  %s421 = sphi %s342, %s442
                $region69: #{tpu_custom_call.1} parent=65 // loop_header_branch
                  %418 = sbr.rel (%p415) target = $region73
                $region70: #{tpu_custom_call.1} parent=65 // loop_body
                  %v422 = vld [vmem:[%s420] sm:$0xff]
                  %423 = vst [vmem:[%s421] sm:$0xff] %v422
                  %v424 = vld [vmem:[%s420 + $0x8] sm:$0xff]
                  %425 = vst [vmem:[%s421 + $0x8] sm:$0xff] %v424
                  %v426 = vld [vmem:[%s420 + $0x10] sm:$0xff]
                  %427 = vst [vmem:[%s421 + $0x10] sm:$0xff] %v426
                  %v428 = vld [vmem:[%s420 + $0x18] sm:$0xff]
                  %429 = vst [vmem:[%s421 + $0x18] sm:$0xff] %v428
                  %v430 = vld [vmem:[%s420 + $0x20] sm:$0xff]
                  %431 = vst [vmem:[%s421 + $0x20] sm:$0xff] %v430
                  %v432 = vld [vmem:[%s420 + $0x28] sm:$0xff]
                  %433 = vst [vmem:[%s421 + $0x28] sm:$0xff] %v432
                  %v434 = vld [vmem:[%s420 + $0x30] sm:$0xff]
                  %435 = vst [vmem:[%s421 + $0x30] sm:$0xff] %v434
                  %s436 = sadd.s32 1, %s419
                  %p437 = scmp.ge.s32.totalorder %s436, %s411
                  %s438 = scalar_select %p437, 0, %s436
                  %s439 = smul.u32 %s438, 56
                  %s440 = smul.u32 %s438, 56
                  %s441 = scalar_lea.vmem %s330, %s439 [#allocation2]
                  %s442 = scalar_lea.vmem %s342, %s440
                $region71: #{tpu_custom_call.1} parent=65 // loop_footer
                  %s416 = sadd.s32 %s414, 1
                $region72: #{tpu_custom_call.1} parent=65 // loop_footer_branch
                  %413 = sbr.rel target = $region68
                $region73: #{tpu_custom_call.1} parent=65 // loop_exit
                  _
                %s443 = sdiv.u32.pop %s337, 7
                %s444 = srem.u32.pop %s337, 7
                %s445 = smul.u32 %s443, 7
                %s446 = smul.u32 8, %s445
                %s447 = scalar_lea.vmem %s330, %s446 [#allocation2]
                %s448 = smul.u32 8, %s445
                %s449 = scalar_lea.vmem %s342, %s448
                // While loop
                $region74: #{tpu_custom_call.1} parent=65 // loop_pre_header
                  _
                $region75: #{tpu_custom_call.1} parent=65 // loop_header
                  %s451 = sphi 0, %s453
                  %p452 = scmp.ge.s32.totalorder %s451, %s444
                  %s456 = sphi 0, %s463
                  %s457 = sphi %s447, %s466
                  %s458 = sphi %s449, %s467
                $region76: #{tpu_custom_call.1} parent=65 // loop_header_branch
                  %455 = sbr.rel (%p452) target = $region80
                $region77: #{tpu_custom_call.1} parent=65 // loop_body
                  %v459 = vld [vmem:[%s457] sm:$0xff]
                  %460 = vst [vmem:[%s458] sm:$0xff] %v459
                  %s461 = sadd.s32 1, %s456
                  %p462 = scmp.ge.s32.totalorder %s461, %s444
                  %s463 = scalar_select %p462, 0, %s461
                  %s464 = smul.u32 %s463, 8
                  %s465 = smul.u32 %s463, 8
                  %s466 = scalar_lea.vmem %s447, %s464 [#allocation2]
                  %s467 = scalar_lea.vmem %s449, %s465
                $region78: #{tpu_custom_call.1} parent=65 // loop_footer
                  %s453 = sadd.s32 %s451, 1
                $region79: #{tpu_custom_call.1} parent=65 // loop_footer_branch
                  %450 = sbr.rel target = $region75
                $region80: #{tpu_custom_call.1} parent=65 // loop_exit
                  _
              $region66: #{tpu_custom_call.1} parent=43 // pred_fallthru
                _
              // Predicated region
              $region81: #{tpu_custom_call.1} parent=43 // pred_check
                _
              $region82: #{tpu_custom_call.1} parent=43 // pred_check_branch
                %469 = sbr.rel target = $region84
              $region83: #{tpu_custom_call.1} parent=43 // pred_region
                _
              $region84: #{tpu_custom_call.1} parent=43 // pred_fallthru
                _
            $region44: #{tpu_custom_call.1} parent=39 // pred_fallthru
              _
            // Predicated region
            $region45: #{tpu_custom_call.1} parent=39 // pred_check
              _
            $region46: #{tpu_custom_call.1} parent=39 // pred_check_branch
              %349 = sbr.rel target = $region48
            $region47: #{tpu_custom_call.1} parent=39 // pred_region
              %s351 = ssub.s32 256, 1
              %s352 = sdiv.u32.pop %s337, 7
              %s353 = srem.u32.pop %s337, 7
              // While loop
              $region49: #{tpu_custom_call.1} parent=47 // loop_pre_header
                _
              $region50: #{tpu_custom_call.1} parent=47 // loop_header
                %s355 = sphi 0, %s357
                %p356 = scmp.ge.s32.totalorder %s355, %s352
                %s360 = sphi 0, %s379
                %s361 = sphi %s330, %s382
                %s362 = sphi %s342, %s383
              $region51: #{tpu_custom_call.1} parent=47 // loop_header_branch
                %359 = sbr.rel (%p356) target = $region55
              $region52: #{tpu_custom_call.1} parent=47 // loop_body
                %v363 = vld [vmem:[%s361] sm:%s351]
                %364 = vst [vmem:[%s362] sm:%s351] %v363
                %v365 = vld [vmem:[%s361 + $0x8] sm:%s351]
                %366 = vst [vmem:[%s362 + $0x8] sm:%s351] %v365
                %v367 = vld [vmem:[%s361 + $0x10] sm:%s351]
                %368 = vst [vmem:[%s362 + $0x10] sm:%s351] %v367
                %v369 = vld [vmem:[%s361 + $0x18] sm:%s351]
                %370 = vst [vmem:[%s362 + $0x18] sm:%s351] %v369
                %v371 = vld [vmem:[%s361 + $0x20] sm:%s351]
                %372 = vst [vmem:[%s362 + $0x20] sm:%s351] %v371
                %v373 = vld [vmem:[%s361 + $0x28] sm:%s351]
                %374 = vst [vmem:[%s362 + $0x28] sm:%s351] %v373
                %v375 = vld [vmem:[%s361 + $0x30] sm:%s351]
                %376 = vst [vmem:[%s362 + $0x30] sm:%s351] %v375
                %s377 = sadd.s32 1, %s360
                %p378 = scmp.ge.s32.totalorder %s377, %s352
                %s379 = scalar_select %p378, 0, %s377
                %s380 = smul.u32 %s379, 56
                %s381 = smul.u32 %s379, 56
                %s382 = scalar_lea.vmem %s330, %s380 [#allocation2]
                %s383 = scalar_lea.vmem %s342, %s381
              $region53: #{tpu_custom_call.1} parent=47 // loop_footer
                %s357 = sadd.s32 %s355, 1
              $region54: #{tpu_custom_call.1} parent=47 // loop_footer_branch
                %354 = sbr.rel target = $region50
              $region55: #{tpu_custom_call.1} parent=47 // loop_exit
                _
              %s384 = sdiv.u32.pop %s337, 7
              %s385 = srem.u32.pop %s337, 7
              %s386 = smul.u32 %s384, 7
              %s387 = smul.u32 8, %s386
              %s388 = scalar_lea.vmem %s330, %s387 [#allocation2]
              %s389 = smul.u32 8, %s386
              %s390 = scalar_lea.vmem %s342, %s389
              // While loop
              $region56: #{tpu_custom_call.1} parent=47 // loop_pre_header
                _
              $region57: #{tpu_custom_call.1} parent=47 // loop_header
                %s392 = sphi 0, %s394
                %p393 = scmp.ge.s32.totalorder %s392, %s385
                %s397 = sphi 0, %s404
                %s398 = sphi %s388, %s407
                %s399 = sphi %s390, %s408
              $region58: #{tpu_custom_call.1} parent=47 // loop_header_branch
                %396 = sbr.rel (%p393) target = $region62
              $region59: #{tpu_custom_call.1} parent=47 // loop_body
                %v400 = vld [vmem:[%s398] sm:%s351]
                %401 = vst [vmem:[%s399] sm:%s351] %v400
                %s402 = sadd.s32 1, %s397
                %p403 = scmp.ge.s32.totalorder %s402, %s385
                %s404 = scalar_select %p403, 0, %s402
                %s405 = smul.u32 %s404, 8
                %s406 = smul.u32 %s404, 8
                %s407 = scalar_lea.vmem %s388, %s405 [#allocation2]
                %s408 = scalar_lea.vmem %s390, %s406
              $region60: #{tpu_custom_call.1} parent=47 // loop_footer
                %s394 = sadd.s32 %s392, 1
              $region61: #{tpu_custom_call.1} parent=47 // loop_footer_branch
                %391 = sbr.rel target = $region57
              $region62: #{tpu_custom_call.1} parent=47 // loop_exit
                _
            $region48: #{tpu_custom_call.1} parent=39 // pred_fallthru
              _
          $region40: #{tpu_custom_call.1} parent=35 // pred_fallthru
            _
          %470 = vnop
        $region36: #{tpu_custom_call.1} parent=31 // pred_fallthru
          _
      $region32: #{tpu_custom_call.1} parent=5 // pred_fallthru
        _
      %p471 = scmp.le.s32.totalorder 2, %s9
      // Predicated region
      $region85: #{tpu_custom_call.1} parent=5 // pred_check
        %p472 = pneg %p471
      $region86: #{tpu_custom_call.1} parent=5 // pred_check_branch
        %474 = sbr.rel (%p472) target = $region88
      $region87: #{tpu_custom_call.1} parent=5 // pred_region
        %s475 = ssub.s32 %s9, 2
        // Predicated region
        $region89: #{tpu_custom_call.1} parent=87 // pred_check
          %p476 = pneg %p130
        $region90: #{tpu_custom_call.1} parent=87 // pred_check_branch
          %478 = sbr.rel (%p476) target = $region92
        $region91: #{tpu_custom_call.1} parent=87 // pred_region
          %s479 = sand.u32 %s115, 1
          %s480 = sand.u32 %s115, 1
          %s481 = smul.addr %s480, 56
          %s482 = scalar_lea.vmem [#allocation2], %s481
        $region92: #{tpu_custom_call.1} parent=87 // pred_fallthru
          _
      $region88: #{tpu_custom_call.1} parent=5 // pred_fallthru
        _
    $region6: #{tpu_custom_call.1} parent=1 // loop_footer
      %s13 = sadd.s32 1, %s9
    $region7: #{tpu_custom_call.1} parent=1 // loop_footer_branch
      %8 = sbr.rel target = $region3
    $region8: #{tpu_custom_call.1} parent=1 // loop_exit
      _

</llo_original>
